<compile_context>
chip_gen: v6e
topology: v6e:2x2x1
jax: 0.10.0
libtpu: 0.0.40
codegen_flags: <defaults>
</compile_context>

<pallas_src>
import math

import jax
import jax.numpy as jnp
from jax import lax
from jax.experimental import pallas as pl
from jax.experimental.pallas import tpu as pltpu


def _round_up(x, m):
    return ((x + m - 1) // m) * m


def _pick_k_tile(K):
    """Contraction tile: full 128-rounded K if <=512 (single step), else 512."""
    K128 = _round_up(K, 128)
    return K128 if K128 <= 512 else 512


def _pick_out_tile(O):
    """Output-channel lane tile: full 128-rounded O if <=512, else 256."""
    O128 = _round_up(O, 128)
    return O128 if O128 <= 512 else 256


def _pick_m_tile(M, cap=1024):
    """Row (sublane) tile: multiple of 16, as large as possible up to `cap`,
    balanced so M_pad = round_up(M, TM) wastes little."""
    if M <= cap:
        return _round_up(M, 16)
    n = math.ceil(M / cap)
    return _round_up(math.ceil(M / n), 16)


def _pick_lane_tile(M, cap=2048):
    """Lane tile (flipped orientation): multiple of 128, up to `cap`, balanced."""
    M128 = _round_up(M, 128)
    if M128 <= cap:
        return M128
    n = math.ceil(M128 / cap)
    return _round_up(math.ceil(M128 / n), 128)


# ---------------------------------------------------------------------------
# Kernels
# ---------------------------------------------------------------------------

def _matmul_bias_kernel_mo(p_ref, w_ref, b_ref, o_ref, acc_ref):
    """Standard orientation: out(TM, TO) = patches(TM, TK) @ weight(TK, TO) + bias.

    p_ref:   (TM, TK)  im2col patches tile (compute dtype)
    w_ref:   (TK, TO)  pre-shuffled lane-dense weight tile
    b_ref:   (1, TO)   bias tile (f32)
    o_ref:   (TM, TO)  output tile
    acc_ref: (TM, TO)  f32 VMEM accumulator (lives across the K grid axis)
    """
    k_idx = pl.program_id(2)

    @pl.when(k_idx == 0)
    def _():
        # Bias folded into the accumulator init (broadcast over sublanes).
        acc_ref[...] = jnp.zeros_like(acc_ref) + b_ref[...]

    acc_ref[...] += jnp.dot(p_ref[...], w_ref[...],
                            preferred_element_type=jnp.float32)

    @pl.when(k_idx == pl.num_programs(2) - 1)
    def _():
        o_ref[...] = acc_ref[...].astype(o_ref.dtype)


def _matmul_bias_kernel_om(w_ref, p_ref, b_ref, o_ref, acc_ref):
    """Flipped orientation (small O): out(O_sub, TM) = W(O_sub, TK) @ patches^T(TK, TM) + bias.

    M sits on the lane axis (unmasked vst); O only pads to 16 sublanes.
    """
    k_idx = pl.program_id(1)

    @pl.when(k_idx == 0)
    def _():
        # Bias folded into the accumulator init (broadcast over lanes).
        acc_ref[...] = jnp.zeros_like(acc_ref) + b_ref[...]

    acc_ref[...] += jnp.dot(w_ref[...], p_ref[...],
                            preferred_element_type=jnp.float32)

    @pl.when(k_idx == pl.num_programs(1) - 1)
    def _():
        o_ref[...] = acc_ref[...].astype(o_ref.dtype)


# ---------------------------------------------------------------------------
# Weight reconstruction / preparation (hoisted out of the per-call path)
# ---------------------------------------------------------------------------

def _reconstruct_weight(params):
    """Mirror of the weight reconstruction in Conv2d_KSE.forward (plain JAX glue)."""
    full_weight = params["full_weight"]              # (O, group_size[-1], k, k)
    O, _, k, _ = full_weight.shape
    cluster_weights = []
    for g in sorted(params["clusters"].keys()):
        cluster = params["clusters"][g]               # (cluster_num[g], group_size[g], k, k)
        cn, gs = cluster.shape[0], cluster.shape[1]
        # cluster.permute(1,0,2,3).reshape(cn*gs, k, k)
        clusters = jnp.transpose(cluster, (1, 0, 2, 3)).reshape(cn * gs, k, k)
        idx = params["cluster_indexs"][g]             # (O * gs,) flat gather indices
        cw = jnp.take(clusters, idx, axis=0).reshape(O, gs, k, k)
        cluster_weights.append(cw)
    if cluster_weights:
        weight = jnp.concatenate([full_weight] + cluster_weights, axis=1)
    else:
        weight = full_weight
    return weight                                     # (O, C_sel, k, k)


def prepare_conv2d_kse(params, *, compute_dtype=jnp.bfloat16,
                       force_orientation=None, small_o_threshold=64):
    """One-time (inference) preparation: reconstruct the KSE weight, pick the
    matmul orientation + K/O tiles, and build the padded lane-dense weight/bias
    slabs in the compute dtype.  Everything here is static w.r.t. the input."""
    # TODO(synk): for fp8 (v7x) / int8 (v5e/v6e) inference, quantize the weight
    # slab here; v7x's MXU has no int8 path so the dtype must be per-generation.
    weight = _reconstruct_weight(params)              # (O, C_sel, k, k)
    bias = params["bias"]                             # (O,)
    O, C_sel, k, _ = weight.shape
    Kdim = k * k * C_sel

    TK = _pick_k_tile(Kdim)
    K_pad = _round_up(Kdim, TK)

    if force_orientation is not None:
        orientation = force_orientation
    else:
        orientation = "om" if O <= small_o_threshold else "mo"

    prep = {
        "orientation": orientation,
        "channels_indexs": params["channels_indexs"],
        "compute_dtype": compute_dtype,
        "O": O, "C_sel": C_sel, "k": k,
        "Kdim": Kdim, "K_pad": K_pad, "TK": TK,
    }

    if orientation == "mo":
        TO = _pick_out_tile(O)
        O_pad = _round_up(O, TO)
        # weight -> (k*k*C, O), rows ordered (ki, kj, c) to match the patches.
        w2 = jnp.transpose(weight, (2, 3, 1, 0)).reshape(Kdim, O)
        prep["w_slab"] = jnp.pad(
            w2, ((0, K_pad - Kdim), (0, O_pad - O))).astype(compute_dtype)
        prep["b_slab"] = jnp.pad(
            bias, (0, O_pad - O)).reshape(1, O_pad).astype(jnp.float32)
        prep["TO"] = TO
        prep["O_pad"] = O_pad
    else:
        # Flipped orientation: weight -> (O, k*k*C), O padded only to sublanes.
        O_sub = _round_up(O, 16)
        w2t = jnp.transpose(weight, (0, 2, 3, 1)).reshape(O, Kdim)
        prep["w_slab"] = jnp.pad(
            w2t, ((0, O_sub - O), (0, K_pad - Kdim))).astype(compute_dtype)
        prep["b_slab"] = jnp.pad(
            bias, (0, O_sub - O)).reshape(O_sub, 1).astype(jnp.float32)
        prep["O_sub"] = O_sub
    return prep


# ---------------------------------------------------------------------------
# Forward
# ---------------------------------------------------------------------------

def conv2d_kse_forward(x_nchw, params=None, *, stride=1, padding=0,
                       compute_dtype=jnp.bfloat16, prepared=None,
                       force_orientation=None):
    if prepared is None:
        prepared = prepare_conv2d_kse(params, compute_dtype=compute_dtype,
                                      force_orientation=force_orientation)

    k = prepared["k"]
    Kdim, K_pad, TK = prepared["Kdim"], prepared["K_pad"], prepared["TK"]
    cdt = prepared["compute_dtype"]
    O = prepared["O"]

    # torch.index_select(input, 1, channels_indexs)
    x_sel = jnp.take(x_nchw, prepared["channels_indexs"], axis=1)   # (N, C_sel, H, W)
    x = jnp.transpose(x_sel, (0, 2, 3, 1))                          # (N, H, W, C_sel)

    # TODO(synk): for very large activations the zero-pad + im2col below should
    # be replaced by halo row-tiling with manual make_async_copy inside the
    # kernel to avoid the k^2 re-read of the activation through HBM; at these
    # layer sizes the fused lane-dense single-matmul formulation dominates.
    x = jnp.pad(x, ((0, 0), (padding, padding), (padding, padding), (0, 0)))
    N, Hp, Wp, C = x.shape
    h_out = (Hp - k) // stride + 1
    w_out = (Wp - k) // stride + 1

    # im2col in the wrapper: feature ordering is (ki, kj, c) with c fastest,
    # matching the weight-slab row ordering.
    taps = []
    for i in range(k):
        for j in range(k):
            taps.append(lax.slice(
                x,
                (0, i, j, 0),
                (N, i + (h_out - 1) * stride + 1, j + (w_out - 1) * stride + 1, C),
                (1, stride, stride, 1)))
    M = N * h_out * w_out
    patches = jnp.concatenate(taps, axis=-1).reshape(M, Kdim)       # (M, k*k*C)

    if prepared["orientation"] == "mo":
        # ------- standard orientation: (M, K) @ (K, O) -------
        TO, O_pad = prepared["TO"], prepared["O_pad"]
        TM = _pick_m_tile(M, 1024)
        M_pad = _round_up(M, TM)

        patches_p = jnp.pad(
            patches, ((0, M_pad - M), (0, K_pad - Kdim))).astype(cdt)

        out = pl.pallas_call(
            _matmul_bias_kernel_mo,
            out_shape=jax.ShapeDtypeStruct((M_pad, O_pad), x_nchw.dtype),
            grid=(M_pad // TM, O_pad // TO, K_pad // TK),
            in_specs=[
                pl.BlockSpec((TM, TK), lambda i, j, kk: (i, kk)),
                pl.BlockSpec((TK, TO), lambda i, j, kk: (kk, j)),
                pl.BlockSpec((1, TO), lambda i, j, kk: (0, j)),
            ],
            out_specs=pl.BlockSpec((TM, TO), lambda i, j, kk: (i, j)),
            scratch_shapes=[pltpu.VMEM((TM, TO), jnp.float32)],
            compiler_params=pltpu.CompilerParams(
                dimension_semantics=("parallel", "parallel", "arbitrary")),
        )(patches_p, prepared["w_slab"], prepared["b_slab"])

        out = out[:M, :O].reshape(N, h_out, w_out, O)
        return jnp.transpose(out, (0, 3, 1, 2))

    # ------- flipped orientation (small O): (O_sub, K) @ (K, M) -------
    O_sub = prepared["O_sub"]
    TM = _pick_lane_tile(M, 2048)
    M_pad = _round_up(M, TM)

    patches_t = jnp.pad(
        patches.T, ((0, K_pad - Kdim), (0, M_pad - M))).astype(cdt)   # (K_pad, M_pad)

    out = pl.pallas_call(
        _matmul_bias_kernel_om,
        out_shape=jax.ShapeDtypeStruct((O_sub, M_pad), x_nchw.dtype),
        grid=(M_pad // TM, K_pad // TK),
        in_specs=[
            pl.BlockSpec((O_sub, TK), lambda i, kk: (0, kk)),
            pl.BlockSpec((TK, TM), lambda i, kk: (kk, i)),
            pl.BlockSpec((O_sub, 1), lambda i, kk: (0, 0)),
        ],
        out_specs=pl.BlockSpec((O_sub, TM), lambda i, kk: (0, i)),
        scratch_shapes=[pltpu.VMEM((O_sub, TM), jnp.float32)],
        compiler_params=pltpu.CompilerParams(
            dimension_semantics=("parallel", "arbitrary")),
    )(prepared["w_slab"], patches_t, prepared["b_slab"])

    out = out[:O, :M].reshape(O, N, h_out, w_out)
    return jnp.transpose(out, (1, 0, 2, 3))


# ---------------------------------------------------------------------------
# Synthetic parameters + reference (test harness)
# ---------------------------------------------------------------------------

def make_kse_params(key, *, input_channels, output_channels, kernel_size, G=4, T=0):
    """Deterministic synthetic KSE state."""
    # TODO(synk): KSE()/density_entropy use sklearn (KMeans, NearestNeighbors);
    # they only *produce* parameters offline and are not part of forward, so we
    # synthesize equivalent deterministic parameters instead.
    O, Cin, k = output_channels, input_channels, kernel_size

    # mask: which group each input channel belongs to
    mask = jnp.array([min(i * G // Cin, G - 1) for i in range(Cin)], jnp.int32)
    group_size = [int(jnp.sum(mask == g)) for g in range(G)]

    cluster_num = [0] * G
    cluster_num[G - 1] = O
    for g in range(1, G - 1):
        cluster_num[g] = math.ceil(O * math.pow(2, g + 1 - T - G))

    keys = jax.random.split(key, 2 * G + 4)

    # full_weight: (O, group_size[-1], k, k)
    full_weight = jax.random.normal(keys[0], (O, group_size[-1], k, k), jnp.float32) * 0.1
    bias = jax.random.normal(keys[1], (O,), jnp.float32) * 0.1

    clusters = {}
    cluster_indexs = {}
    for g in range(1, G - 1):
        if group_size[g] == 0:
            continue
        cn, gs = cluster_num[g], group_size[g]
        clusters[g] = jax.random.normal(keys[2 + 2 * g], (cn, gs, k, k), jnp.float32) * 0.1
        idx = jax.random.randint(keys[3 + 2 * g], (O, gs), 0, cn, jnp.int32)
        cluster_indexs[g] = (idx + cn * jnp.arange(gs, dtype=jnp.int32)[None, :]).reshape(-1)

    # channels_indexs: channels of the last group first, then groups 1..G-2
    all_indexs = [i for i in range(Cin) if int(mask[i]) == G - 1]
    for g in range(1, G - 1):
        all_indexs += [i for i in range(Cin) if int(mask[i]) == g]
    channels_indexs = jnp.array(all_indexs, jnp.int32)

    return {
        "full_weight": full_weight,
        "bias": bias,
        "clusters": clusters,
        "cluster_indexs": cluster_indexs,
        "channels_indexs": channels_indexs,
    }


def _reference_forward(x_nchw, params, *, stride, padding, cast_dtype=None):
    """Pure-JAX reference mirroring F.conv2d on the reconstructed weight."""
    weight = _reconstruct_weight(params)
    x_sel = jnp.take(x_nchw, params["channels_indexs"], axis=1)
    if cast_dtype is not None:
        weight = weight.astype(cast_dtype).astype(jnp.float32)
        x_sel = x_sel.astype(cast_dtype).astype(jnp.float32)
    out = lax.conv_general_dilated(
        x_sel, weight, window_strides=(stride, stride),
        padding=[(padding, padding), (padding, padding)],
        dimension_numbers=("NCHW", "OIHW", "NCHW"))
    return out + params["bias"][None, :, None, None]


if __name__ == "__main__":
    # Small config consistent with the module: Conv2d_KSE(8, 8, 3, stride=1, padding=1, G=4, T=0)
    input_channels, output_channels, kernel_size = 8, 8, 3
    stride, padding = 1, 1
    N, H, W = 2, 16, 16

    key = jax.random.PRNGKey(0)
    k_x, k_p = jax.random.split(key)
    params = make_kse_params(k_p, input_channels=input_channels,
                             output_channels=output_channels,
                             kernel_size=kernel_size, G=4, T=0)
    x = jax.random.normal(k_x, (N, input_channels, H, W), jnp.float32)

    ref_f32 = jax.block_until_ready(
        _reference_forward(x, params, stride=stride, padding=padding))

    # --- f32 compute, flipped (small-O) orientation: tight check ---
    prep_f32_om = prepare_conv2d_kse(params, compute_dtype=jnp.float32)
    out_om = jax.block_until_ready(
        conv2d_kse_forward(x, prepared=prep_f32_om, stride=stride, padding=padding))
    assert out_om.shape == ref_f32.shape, (out_om.shape, ref_f32.shape)
    err_om = float(jnp.max(jnp.abs(out_om - ref_f32)))
    assert jnp.allclose(out_om, ref_f32, atol=2e-3, rtol=2e-3), err_om

    # --- f32 compute, standard (M,O) orientation: exercises the other kernel ---
    prep_f32_mo = prepare_conv2d_kse(params, compute_dtype=jnp.float32,
                                     force_orientation="mo")
    out_mo = jax.block_until_ready(
        conv2d_kse_forward(x, prepared=prep_f32_mo, stride=stride, padding=padding))
    err_mo = float(jnp.max(jnp.abs(out_mo - ref_f32)))
    assert jnp.allclose(out_mo, ref_f32, atol=2e-3, rtol=2e-3), err_mo

    # --- bf16 compute (default, MXU-native), compared against a reference that
    #     applies the same bf16 rounding to inputs/weight (f32 accumulation) ---
    prep_bf16 = prepare_conv2d_kse(params, compute_dtype=jnp.bfloat16)
    out_bf16 = jax.block_until_ready(
        conv2d_kse_forward(x, prepared=prep_bf16, stride=stride, padding=padding))
    ref_bf16 = jax.block_until_ready(
        _reference_forward(x, params, stride=stride, padding=padding,
                           cast_dtype=jnp.bfloat16))
    err_bf16 = float(jnp.max(jnp.abs(out_bf16 - ref_bf16)))
    assert jnp.allclose(out_bf16, ref_bf16, atol=2e-3, rtol=2e-3), err_bf16

    print("KERNEL_OK")
</pallas_src>

<mosaic_0001>
module attributes {stable_mosaic.version = 11 : i64} {
  func.func @_matmul_bias_kernel_om(%arg0: i32, %arg1: i32, %arg2: memref<16x128xf32, #tpu.memory_space<vmem>>, %arg3: memref<128x512xf32, #tpu.memory_space<vmem>>, %arg4: memref<16x1xf32, #tpu.memory_space<vmem>>, %arg5: memref<16x512xf32, #tpu.memory_space<vmem>>, %arg6: memref<16x512xf32, #tpu.memory_space<vmem>>) attributes {dimension_semantics = [#tpu.dimension_semantics<parallel>, #tpu.dimension_semantics<arbitrary>], iteration_bounds = array<i64: 1, 1>, scalar_prefetch = 0 : i64, scratch_operands = 1 : i64, tpu.core_type = #tpu.core_type<tc>, window_params = [{transform_indices = @transform_0, window_bounds = array<i64: 16, 128>}, {transform_indices = @transform_1, window_bounds = array<i64: 128, 512>}, {pipeline_mode = #tpu.pipeline_mode<synchronous>, transform_indices = @transform_2, window_bounds = array<i64: 16, 1>}, {transform_indices = @transform_3, window_bounds = array<i64: 16, 512>}]} {
    %c0_i32 = arith.constant 0 : i32
    %0 = arith.cmpi eq, %arg1, %c0_i32 : i32
    %1 = arith.extui %0 : i1 to i32
    %c0_i32_0 = arith.constant 0 : i32
    %2 = arith.cmpi ne, %1, %c0_i32_0 : i32
    scf.if %2 {
      %cst_10 = arith.constant 0.000000e+00 : f32
      %12 = vector.broadcast %cst_10 : f32 to vector<16x512xf32>
      %c0_11 = arith.constant 0 : index
      %c0_12 = arith.constant 0 : index
      %13 = vector.load %arg4[%c0_11, %c0_12] : memref<16x1xf32, #tpu.memory_space<vmem>>, vector<16x1xf32>
      %14 = vector.broadcast %13 : vector<16x1xf32> to vector<16x512xf32>
      %15 = arith.addf %12, %14 : vector<16x512xf32>
      %c0_13 = arith.constant 0 : index
      %c0_14 = arith.constant 0 : index
      %16 = vector.load %arg6[%c0_13, %c0_14] : memref<16x512xf32, #tpu.memory_space<vmem>>, vector<16x512xf32>
      tpu.vector_store %arg6[%c0_13, %c0_14], %15 {strides = array<i32>} : memref<16x512xf32, #tpu.memory_space<vmem>>, vector<16x512xf32>,
    } else {
    }
    %c0 = arith.constant 0 : index
    %c0_1 = arith.constant 0 : index
    %3 = vector.load %arg6[%c0, %c0_1] : memref<16x512xf32, #tpu.memory_space<vmem>>, vector<16x512xf32>
    %c0_2 = arith.constant 0 : index
    %c0_3 = arith.constant 0 : index
    %4 = vector.load %arg2[%c0_2, %c0_3] : memref<16x128xf32, #tpu.memory_space<vmem>>, vector<16x128xf32>
    %c0_4 = arith.constant 0 : index
    %c0_5 = arith.constant 0 : index
    %5 = vector.load %arg3[%c0_4, %c0_5] : memref<128x512xf32, #tpu.memory_space<vmem>>, vector<128x512xf32>
    %cst = arith.constant dense<0.000000e+00> : vector<16x512xf32>
    %6 = tpu.matmul %4, %5, %cst {dimension_numbers = #tpu.dot_dimension_numbers<[1], [0], [0], [1], [0, 0, 1, 1], [], []>} : vector<16x128xf32>, vector<128x512xf32>, vector<16x512xf32> -> vector<16x512xf32>
    %7 = arith.addf %3, %6 : vector<16x512xf32>
    %c0_6 = arith.constant 0 : index
    %c0_7 = arith.constant 0 : index
    %8 = vector.load %arg6[%c0_6, %c0_7] : memref<16x512xf32, #tpu.memory_space<vmem>>, vector<16x512xf32>
    tpu.vector_store %arg6[%c0_6, %c0_7], %7 {strides = array<i32>} : memref<16x512xf32, #tpu.memory_space<vmem>>, vector<16x512xf32>,
    %c0_i32_8 = arith.constant 0 : i32
    %9 = arith.cmpi eq, %arg1, %c0_i32_8 : i32
    %10 = arith.extui %9 : i1 to i32
    %c0_i32_9 = arith.constant 0 : i32
    %11 = arith.cmpi ne, %10, %c0_i32_9 : i32
    scf.if %11 {
      %c0_10 = arith.constant 0 : index
      %c0_11 = arith.constant 0 : index
      %12 = vector.load %arg6[%c0_10, %c0_11] : memref<16x512xf32, #tpu.memory_space<vmem>>, vector<16x512xf32>
      %c0_12 = arith.constant 0 : index
      %c0_13 = arith.constant 0 : index
      %13 = vector.load %arg5[%c0_12, %c0_13] : memref<16x512xf32, #tpu.memory_space<vmem>>, vector<16x512xf32>
      tpu.vector_store %arg5[%c0_12, %c0_13], %12 {strides = array<i32>} : memref<16x512xf32, #tpu.memory_space<vmem>>, vector<16x512xf32>,
    } else {
    }
    return
  }
  func.func @transform_0(%arg0: i32, %arg1: i32) -> (i32, i32) {
    %c0_i32 = arith.constant 0 : i32
    %c0_i32_0 = arith.constant 0 : i32
    return %c0_i32, %arg1 : i32, i32
  }
  func.func @transform_1(%arg0: i32, %arg1: i32) -> (i32, i32) {
    %c0_i32 = arith.constant 0 : i32
    return %arg1, %arg0 : i32, i32
  }
  func.func @transform_2(%arg0: i32, %arg1: i32) -> (i32, i32) {
    %c0_i32 = arith.constant 0 : i32
    %c0_i32_0 = arith.constant 0 : i32
    %c0_i32_1 = arith.constant 0 : i32
    return %c0_i32, %c0_i32_0 : i32, i32
  }
  func.func @transform_3(%arg0: i32, %arg1: i32) -> (i32, i32) {
    %c0_i32 = arith.constant 0 : i32
    %c0_i32_0 = arith.constant 0 : i32
    return %c0_i32, %arg0 : i32, i32
  }
}

</mosaic_0001>

<llo_original>
// kernel: tpu_custom_call.1
$region0: #{tpu_custom_call.1}
  #allocation0 [shape = 'u32[]', space=smem, size = 0x4, offset = 0x4, fixed_abs, tag = 'smem constant byte address 0x4 - core index']
  #allocation1 [shape = 'u32[144,128]{1,0:T(1,128)}', space=vmem, size = 0x12000, scoped, tag = 'internal scratch']
  #allocation2 [shape = 'f32[16,512]{1,0:T(8,128)}', space=vmem, size = 0x8000, scoped, tag = 'scratch operand']
  %s0 = inlined_call_operand.vmem [shape: f32[16,128], index: 0, kind: input, shape index: {}]
  %s1 = inlined_call_operand.hbm [shape: f32[128,512], index: 1, kind: input, shape index: {}]
  %s2 = inlined_call_operand.vmem [shape: f32[16,1], index: 2, kind: input, shape index: {}]
  %s3 = inlined_call_operand.hbm [shape: f32[16,512], index: 3, kind: output, shape index: {}]
  %s4 = sld [smem:[#allocation0]]
  $region34: #{tpu_custom_call.1} parent=0
    _
  %s6 = ssub.s32 1, %s4
  %s7 = scalar_select 0, %s6, %s4
  $region1: #{tpu_custom_call.1} parent=0
    #allocation3 [shape = 'u8[262144]{0}', space=vmem, size = 0x40000, scoped, tag = 'input window, operand 1, single buffered']
    #allocation4 [shape = 's32[1]{0}', space=sflag, size = 0x4, scoped, tag = 'scoped memory for tpu_custom_call.1']
    #allocation5 [shape = 's32[1]{0}', space=sflag, size = 0x4, scoped, tag = 'scoped memory for tpu_custom_call.1']
    #allocation6 [shape = 'u8[32768]{0}', space=vmem, size = 0x8000, scoped, tag = 'output window, operand 0, single buffered']
    %8 = vsyncpa [#allocation4], 0
    %9 = vsyncpa [#allocation5], 0
    // Predicated region
    $region2: #{tpu_custom_call.1} parent=1 // pred_check
      _
    $region3: #{tpu_custom_call.1} parent=1 // pred_check_branch
      %11 = sbr.rel (0) target = $region5
    $region4: #{tpu_custom_call.1} parent=1 // pred_region
      _
    $region5: #{tpu_custom_call.1} parent=1 // pred_fallthru
      _
    // Predicated region
    $region6: #{tpu_custom_call.1} parent=1 // pred_check
      _
    $region7: #{tpu_custom_call.1} parent=1 // pred_check_branch
      %13 = sbr.rel (0) target = $region9
    $region8: #{tpu_custom_call.1} parent=1 // pred_region
      %s15 = ssub.s32 8192, 8192
      %16 = vsyncadd [#allocation4], %s15
      %s17 = sshll.u32 [#allocation3], 4
      %s18 = int_to_ptr.vmem [resolvable:$true] %s17
      %23 = dma.hbm_to_vmem [thread:$0]  %s1, 8192, %s18, [#allocation4], 512, 512, 32
    $region9: #{tpu_custom_call.1} parent=1 // pred_fallthru
      _
    // Predicated region
    $region10: #{tpu_custom_call.1} parent=1 // pred_check
      _
    $region11: #{tpu_custom_call.1} parent=1 // pred_check_branch
      %25 = sbr.rel (0) target = $region13
    $region12: #{tpu_custom_call.1} parent=1 // pred_region
      _
    $region13: #{tpu_custom_call.1} parent=1 // pred_fallthru
      _
    // Predicated region
    $region14: #{tpu_custom_call.1} parent=1 // pred_check
      _
    $region15: #{tpu_custom_call.1} parent=1 // pred_check_branch
      %27 = sbr.rel (0) target = $region17
    $region16: #{tpu_custom_call.1} parent=1 // pred_region
      %28 = dma.done [#allocation4], 8192
    $region17: #{tpu_custom_call.1} parent=1 // pred_fallthru
      _
    %p29 = scmp.eq.s32.totalorder 0, 0
    // Predicated region
    $region18: #{tpu_custom_call.1} parent=1 // pred_check
      %p30 = pneg %p29
    $region19: #{tpu_custom_call.1} parent=1 // pred_check_branch
      %32 = sbr.rel (%p30) target = $region21
    $region20: #{tpu_custom_call.1} parent=1 // pred_region
      %v33 = vld [vmem:[%s2] sm:$0xff]
      %v34 = vld [vmem:[%s2 + $0x8] sm:$0xff]
      %36 = vset.pattern.permute.xlu0 0
      %37 = vperm.xlu0 %36, %v33
      %v38 = vpop.permute.xlu0 %37
      %41 = vset.pattern.permute.xlu0 0
      %42 = vperm.xlu0 %41, %v34
      %v43 = vpop.permute.xlu0 %42
      %v45 = vadd.f32 %v38, 0.0
      %v46 = vadd.f32 %v43, 0.0
      %47 = vst [vmem:[#allocation2] sm:$0xff] %v45
      %48 = vst [vmem:[#allocation2 + $0x8] sm:$0xff] %v45
      %49 = vst [vmem:[#allocation2 + $0x10] sm:$0xff] %v45
      %50 = vst [vmem:[#allocation2 + $0x18] sm:$0xff] %v45
      %51 = vst [vmem:[#allocation2 + $0x20] sm:$0xff] %v46
      %52 = vst [vmem:[#allocation2 + $0x28] sm:$0xff] %v46
      %53 = vst [vmem:[#allocation2 + $0x30] sm:$0xff] %v46
      %54 = vst [vmem:[#allocation2 + $0x38] sm:$0xff] %v46
    $region21: #{tpu_custom_call.1} parent=1 // pred_fallthru
      _
    %v55 = vld [vmem:[#allocation2] sm:$0xff]
    %v56 = vld [vmem:[#allocation2 + $0x8] sm:$0xff]
    %v57 = vld [vmem:[#allocation2 + $0x10] sm:$0xff]
    %v58 = vld [vmem:[#allocation2 + $0x18] sm:$0xff]
    %v59 = vld [vmem:[#allocation2 + $0x20] sm:$0xff]
    %v60 = vld [vmem:[#allocation2 + $0x28] sm:$0xff]
    %v61 = vld [vmem:[#allocation2 + $0x30] sm:$0xff]
    %v62 = vld [vmem:[#allocation2 + $0x38] sm:$0xff]
    %v63 = vld [vmem:[%s0] sm:$0xff]
    %v64 = vld [vmem:[%s0 + $0x8] sm:$0xff]
    %v65 = vld [vmem:[#allocation3] sm:$0xff]
    %v66 = vld [vmem:[#allocation3 + $0x8] sm:$0xff]
    %v67 = vld [vmem:[#allocation3 + $0x10] sm:$0xff]
    %v68 = vld [vmem:[#allocation3 + $0x18] sm:$0xff]
    %v69 = vld [vmem:[#allocation3 + $0x20] sm:$0xff]
    %v70 = vld [vmem:[#allocation3 + $0x28] sm:$0xff]
    %v71 = vld [vmem:[#allocation3 + $0x30] sm:$0xff]
    %v72 = vld [vmem:[#allocation3 + $0x38] sm:$0xff]
    %v73 = vld [vmem:[#allocation3 + $0x40] sm:$0xff]
    %v74 = vld [vmem:[#allocation3 + $0x48] sm:$0xff]
    %v75 = vld [vmem:[#allocation3 + $0x50] sm:$0xff]
    %v76 = vld [vmem:[#allocation3 + $0x58] sm:$0xff]
    %v77 = vld [vmem:[#allocation3 + $0x60] sm:$0xff]
    %v78 = vld [vmem:[#allocation3 + $0x68] sm:$0xff]
    %v79 = vld [vmem:[#allocation3 + $0x70] sm:$0xff]
    %v80 = vld [vmem:[#allocation3 + $0x78] sm:$0xff]
    %v81 = vld [vmem:[#allocation3 + $0x80] sm:$0xff]
    %v82 = vld [vmem:[#allocation3 + $0x88] sm:$0xff]
    %v83 = vld [vmem:[#allocation3 + $0x90] sm:$0xff]
    %v84 = vld [vmem:[#allocation3 + $0x98] sm:$0xff]
    %v85 = vld [vmem:[#allocation3 + $0xa0] sm:$0xff]
    %v86 = vld [vmem:[#allocation3 + $0xa8] sm:$0xff]
    %v87 = vld [vmem:[#allocation3 + $0xb0] sm:$0xff]
    %v88 = vld [vmem:[#allocation3 + $0xb8] sm:$0xff]
    %v89 = vld [vmem:[#allocation3 + $0xc0] sm:$0xff]
    %v90 = vld [vmem:[#allocation3 + $0xc8] sm:$0xff]
    %v91 = vld [vmem:[#allocation3 + $0xd0] sm:$0xff]
    %v92 = vld [vmem:[#allocation3 + $0xd8] sm:$0xff]
    %v93 = vld [vmem:[#allocation3 + $0xe0] sm:$0xff]
    %v94 = vld [vmem:[#allocation3 + $0xe8] sm:$0xff]
    %v95 = vld [vmem:[#allocation3 + $0xf0] sm:$0xff]
    %v96 = vld [vmem:[#allocation3 + $0xf8] sm:$0xff]
    %v97 = vld [vmem:[#allocation3 + $0x100] sm:$0xff]
    %v98 = vld [vmem:[#allocation3 + $0x108] sm:$0xff]
    %v99 = vld [vmem:[#allocation3 + $0x110] sm:$0xff]
    %v100 = vld [vmem:[#allocation3 + $0x118] sm:$0xff]
    %v101 = vld [vmem:[#allocation3 + $0x120] sm:$0xff]
    %v102 = vld [vmem:[#allocation3 + $0x128] sm:$0xff]
    %v103 = vld [vmem:[#allocation3 + $0x130] sm:$0xff]
    %v104 = vld [vmem:[#allocation3 + $0x138] sm:$0xff]
    %v105 = vld [vmem:[#allocation3 + $0x140] sm:$0xff]
    %v106 = vld [vmem:[#allocation3 + $0x148] sm:$0xff]
    %v107 = vld [vmem:[#allocation3 + $0x150] sm:$0xff]
    %v108 = vld [vmem:[#allocation3 + $0x158] sm:$0xff]
    %v109 = vld [vmem:[#allocation3 + $0x160] sm:$0xff]
    %v110 = vld [vmem:[#allocation3 + $0x168] sm:$0xff]
    %v111 = vld [vmem:[#allocation3 + $0x170] sm:$0xff]
    %v112 = vld [vmem:[#allocation3 + $0x178] sm:$0xff]
    %v113 = vld [vmem:[#allocation3 + $0x180] sm:$0xff]
    %v114 = vld [vmem:[#allocation3 + $0x188] sm:$0xff]
    %v115 = vld [vmem:[#allocation3 + $0x190] sm:$0xff]
    %v116 = vld [vmem:[#allocation3 + $0x198] sm:$0xff]
    %v117 = vld [vmem:[#allocation3 + $0x1a0] sm:$0xff]
    %v118 = vld [vmem:[#allocation3 + $0x1a8] sm:$0xff]
    %v119 = vld [vmem:[#allocation3 + $0x1b0] sm:$0xff]
    %v120 = vld [vmem:[#allocation3 + $0x1b8] sm:$0xff]
    %v121 = vld [vmem:[#allocation3 + $0x1c0] sm:$0xff]
    %v122 = vld [vmem:[#allocation3 + $0x1c8] sm:$0xff]
    %v123 = vld [vmem:[#allocation3 + $0x1d0] sm:$0xff]
    %v124 = vld [vmem:[#allocation3 + $0x1d8] sm:$0xff]
    %v125 = vld [vmem:[#allocation3 + $0x1e0] sm:$0xff]
    %v126 = vld [vmem:[#allocation3 + $0x1e8] sm:$0xff]
    %v127 = vld [vmem:[#allocation3 + $0x1f0] sm:$0xff]
    %v128 = vld [vmem:[#allocation3 + $0x1f8] sm:$0xff]
    %129 = vmatprep.subr.mxu0 %v126
    %130 = vmatpush1.msra.mxu0 %v125
    %131 = vmatprep.subr.mxu0 %v122
    %132 = vmatpush1.msra.mxu0 %v121
    %133 = vmatprep.subr.mxu0 %v118
    %134 = vmatpush1.msra.mxu0 %v117
    %135 = vmatprep.subr.mxu0 %v114
    %136 = vmatpush1.msra.mxu0 %v113
    %137 = vmatprep.subr.mxu0 %v110
    %138 = vmatpush1.msra.mxu0 %v109
    %139 = vmatprep.subr.mxu0 %v106
    %140 = vmatpush1.msra.mxu0 %v105
    %141 = vmatprep.subr.mxu0 %v102
    %142 = vmatpush1.msra.mxu0 %v101
    %143 = vmatprep.subr.mxu0 %v98
    %144 = vmatpush1.msra.mxu0 %v97
    %145 = vmatprep.subr.mxu0 %v94
    %146 = vmatpush1.msra.mxu0 %v93
    %147 = vmatprep.subr.mxu0 %v90
    %148 = vmatpush1.msra.mxu0 %v89
    %149 = vmatprep.subr.mxu0 %v86
    %150 = vmatpush1.msra.mxu0 %v85
    %151 = vmatprep.subr.mxu0 %v82
    %152 = vmatpush1.msra.mxu0 %v81
    %153 = vmatprep.subr.mxu0 %v78
    %154 = vmatpush1.msra.mxu0 %v77
    %155 = vmatprep.subr.mxu0 %v74
    %156 = vmatpush1.msra.mxu0 %v73
    %157 = vmatprep.subr.mxu0 %v70
    %158 = vmatpush1.msra.mxu0 %v69
    %159 = vmatprep.subr.mxu0 %v66
    %160 = vmatpush1.msra.mxu0 %v65
    %161 = vmatprep.subr.mxu0 0.0
    %162 = vmatpush2.msra.mxu0 0.0
    %163 = vmatprep.subr.mxu0 0.0
    %164 = vmatpush2.msra.mxu0 0.0
    %165 = vmatprep.subr.mxu0 0.0
    %166 = vmatpush2.msra.mxu0 0.0
    %167 = vmatprep.subr.mxu0 0.0
    %168 = vmatpush2.msra.mxu0 0.0
    %169 = vmatprep.subr.mxu0 0.0
    %170 = vmatpush2.msra.mxu0 0.0
    %171 = vmatprep.subr.mxu0 0.0
    %172 = vmatpush2.msra.mxu0 0.0
    %173 = vmatprep.subr.mxu0 0.0
    %174 = vmatpush2.msra.mxu0 0.0
    %175 = vmatprep.subr.mxu0 0.0
    %176 = vmatpush2.msra.mxu0 0.0
    %177 = vmatprep.subr.mxu0 0.0
    %178 = vmatpush2.msra.mxu0 0.0
    %179 = vmatprep.subr.mxu0 0.0
    %180 = vmatpush2.msra.mxu0 0.0
    %181 = vmatprep.subr.mxu0 0.0
    %182 = vmatpush2.msra.mxu0 0.0
    %183 = vmatprep.subr.mxu0 0.0
    %184 = vmatpush2.msra.mxu0 0.0
    %185 = vmatprep.subr.mxu0 0.0
    %186 = vmatpush2.msra.mxu0 0.0
    %187 = vmatprep.subr.mxu0 0.0
    %188 = vmatpush2.msra.mxu0 0.0
    %189 = vmatprep.subr.mxu0 0.0
    %190 = vmatpush2.msra.mxu0 0.0
    %191 = vmatprep.subr.mxu0 0.0
    %192 = vmatpush2.msra.mxu0 0.0
    %193 = vmatprep.mubr.f32.mxu0 0.0
    %194 = vmatmul.mubr.f32.gmra.mxu0 %v63
    %v195 = vpop.f32.mrf.mxu0
    %v196 = vadd.f32 0.0, %v195
    %v197 = vpop.f32.mrf.mxu0
    %v198 = vadd.f32 0.0, %v197
    %199 = vmatprep.mubr.f32.mxu0 0.0
    %200 = vmatmul.mubr.f32.gmra.mxu0 %v64
    %v201 = vpop.f32.mrf.mxu0
    %v202 = vadd.f32 0.0, %v201
    %v203 = vpop.f32.mrf.mxu0
    %v204 = vadd.f32 0.0, %v203
    %205 = vdwg.mxu0
    %206 = vmatprep.subr.mxu0 %v128
    %207 = vmatpush1.msra.mxu0 %v127
    %208 = vmatprep.subr.mxu0 %v124
    %209 = vmatpush1.msra.mxu0 %v123
    %210 = vmatprep.subr.mxu0 %v120
    %211 = vmatpush1.msra.mxu0 %v119
    %212 = vmatprep.subr.mxu0 %v116
    %213 = vmatpush1.msra.mxu0 %v115
    %214 = vmatprep.subr.mxu0 %v112
    %215 = vmatpush1.msra.mxu0 %v111
    %216 = vmatprep.subr.mxu0 %v108
    %217 = vmatpush1.msra.mxu0 %v107
    %218 = vmatprep.subr.mxu0 %v104
    %219 = vmatpush1.msra.mxu0 %v103
    %220 = vmatprep.subr.mxu0 %v100
    %221 = vmatpush1.msra.mxu0 %v99
    %222 = vmatprep.subr.mxu0 %v96
    %223 = vmatpush1.msra.mxu0 %v95
    %224 = vmatprep.subr.mxu0 %v92
    %225 = vmatpush1.msra.mxu0 %v91
    %226 = vmatprep.subr.mxu0 %v88
    %227 = vmatpush1.msra.mxu0 %v87
    %228 = vmatprep.subr.mxu0 %v84
    %229 = vmatpush1.msra.mxu0 %v83
    %230 = vmatprep.subr.mxu0 %v80
    %231 = vmatpush1.msra.mxu0 %v79
    %232 = vmatprep.subr.mxu0 %v76
    %233 = vmatpush1.msra.mxu0 %v75
    %234 = vmatprep.subr.mxu0 %v72
    %235 = vmatpush1.msra.mxu0 %v71
    %236 = vmatprep.subr.mxu0 %v68
    %237 = vmatpush1.msra.mxu0 %v67
    %238 = vmatprep.subr.mxu0 0.0
    %239 = vmatpush2.msra.mxu0 0.0
    %240 = vmatprep.subr.mxu0 0.0
    %241 = vmatpush2.msra.mxu0 0.0
    %242 = vmatprep.subr.mxu0 0.0
    %243 = vmatpush2.msra.mxu0 0.0
    %244 = vmatprep.subr.mxu0 0.0
    %245 = vmatpush2.msra.mxu0 0.0
    %246 = vmatprep.subr.mxu0 0.0
    %247 = vmatpush2.msra.mxu0 0.0
    %248 = vmatprep.subr.mxu0 0.0
    %249 = vmatpush2.msra.mxu0 0.0
    %250 = vmatprep.subr.mxu0 0.0
    %251 = vmatpush2.msra.mxu0 0.0
    %252 = vmatprep.subr.mxu0 0.0
    %253 = vmatpush2.msra.mxu0 0.0
    %254 = vmatprep.subr.mxu0 0.0
    %255 = vmatpush2.msra.mxu0 0.0
    %256 = vmatprep.subr.mxu0 0.0
    %257 = vmatpush2.msra.mxu0 0.0
    %258 = vmatprep.subr.mxu0 0.0
    %259 = vmatpush2.msra.mxu0 0.0
    %260 = vmatprep.subr.mxu0 0.0
    %261 = vmatpush2.msra.mxu0 0.0
    %262 = vmatprep.subr.mxu0 0.0
    %263 = vmatpush2.msra.mxu0 0.0
    %264 = vmatprep.subr.mxu0 0.0
    %265 = vmatpush2.msra.mxu0 0.0
    %266 = vmatprep.subr.mxu0 0.0
    %267 = vmatpush2.msra.mxu0 0.0
    %268 = vmatprep.subr.mxu0 0.0
    %269 = vmatpush2.msra.mxu0 0.0
    %270 = vmatprep.mubr.f32.mxu0 0.0
    %271 = vmatmul.mubr.f32.gmra.mxu0 %v63
    %v272 = vpop.f32.mrf.mxu0
    %v273 = vadd.f32 0.0, %v272
    %v274 = vpop.f32.mrf.mxu0
    %v275 = vadd.f32 0.0, %v274
    %276 = vmatprep.mubr.f32.mxu0 0.0
    %277 = vmatmul.mubr.f32.gmra.mxu0 %v64
    %v278 = vpop.f32.mrf.mxu0
    %v279 = vadd.f32 0.0, %v278
    %v280 = vpop.f32.mrf.mxu0
    %v281 = vadd.f32 0.0, %v280
    %282 = vdwg.mxu0
    %v283 = vadd.f32 %v55, %v196
    %v284 = vadd.f32 %v56, %v198
    %v285 = vadd.f32 %v57, %v273
    %v286 = vadd.f32 %v58, %v275
    %v287 = vadd.f32 %v59, %v202
    %v288 = vadd.f32 %v60, %v204
    %v289 = vadd.f32 %v61, %v279
    %v290 = vadd.f32 %v62, %v281
    %291 = vst [vmem:[#allocation2] sm:$0xff] %v283
    %292 = vst [vmem:[#allocation2 + $0x8] sm:$0xff] %v284
    %293 = vst [vmem:[#allocation2 + $0x10] sm:$0xff] %v285
    %294 = vst [vmem:[#allocation2 + $0x18] sm:$0xff] %v286
    %295 = vst [vmem:[#allocation2 + $0x20] sm:$0xff] %v287
    %296 = vst [vmem:[#allocation2 + $0x28] sm:$0xff] %v288
    %297 = vst [vmem:[#allocation2 + $0x30] sm:$0xff] %v289
    %298 = vst [vmem:[#allocation2 + $0x38] sm:$0xff] %v290
    // Predicated region
    $region22: #{tpu_custom_call.1} parent=1 // pred_check
      %p299 = pneg %p29
    $region23: #{tpu_custom_call.1} parent=1 // pred_check_branch
      %301 = sbr.rel (%p299) target = $region25
    $region24: #{tpu_custom_call.1} parent=1 // pred_region
      %v302 = vld [vmem:[#allocation2] sm:$0xff]
      %v303 = vld [vmem:[#allocation2 + $0x8] sm:$0xff]
      %v304 = vld [vmem:[#allocation2 + $0x10] sm:$0xff]
      %v305 = vld [vmem:[#allocation2 + $0x18] sm:$0xff]
      %v306 = vld [vmem:[#allocation2 + $0x20] sm:$0xff]
      %v307 = vld [vmem:[#allocation2 + $0x28] sm:$0xff]
      %v308 = vld [vmem:[#allocation2 + $0x30] sm:$0xff]
      %v309 = vld [vmem:[#allocation2 + $0x38] sm:$0xff]
      %310 = vst [vmem:[#allocation6] sm:$0xff] %v302
      %311 = vst [vmem:[#allocation6 + $0x8] sm:$0xff] %v303
      %312 = vst [vmem:[#allocation6 + $0x10] sm:$0xff] %v304
      %313 = vst [vmem:[#allocation6 + $0x18] sm:$0xff] %v305
      %314 = vst [vmem:[#allocation6 + $0x20] sm:$0xff] %v306
      %315 = vst [vmem:[#allocation6 + $0x28] sm:$0xff] %v307
      %316 = vst [vmem:[#allocation6 + $0x30] sm:$0xff] %v308
      %317 = vst [vmem:[#allocation6 + $0x38] sm:$0xff] %v309
    $region25: #{tpu_custom_call.1} parent=1 // pred_fallthru
      _
    // Predicated region
    $region26: #{tpu_custom_call.1} parent=1 // pred_check
      _
    $region27: #{tpu_custom_call.1} parent=1 // pred_check_branch
      %319 = sbr.rel (0) target = $region29
    $region28: #{tpu_custom_call.1} parent=1 // pred_region
      %s321 = ssub.s32 1024, 1024
      %322 = vsyncadd [#allocation5], %s321
      %s323 = sshll.u32 [#allocation6], 4
      %s324 = int_to_ptr.vmem [resolvable:$true] %s323
      %329 = dma.vmem_to_hbm [thread:$0]  %s324, 1024, %s3, [#allocation5], 512, 512, 32
    $region29: #{tpu_custom_call.1} parent=1 // pred_fallthru
      _
    // Predicated region
    $region30: #{tpu_custom_call.1} parent=1 // pred_check
      _
    $region31: #{tpu_custom_call.1} parent=1 // pred_check_branch
      %331 = sbr.rel (0) target = $region33
    $region32: #{tpu_custom_call.1} parent=1 // pred_region
      %332 = dma.done [#allocation5], 1024
    $region33: #{tpu_custom_call.1} parent=1 // pred_fallthru
      _
    %333 = vsyncpa [#allocation4], 1
    %334 = vsyncpa [#allocation5], 1

</llo_original>
